<compile_context>
chip_gen: v5e
topology: v5e:2x2
jax: 0.10.0
libtpu: 0.0.40
codegen_flags: <defaults>
</compile_context>

<pallas_src>
import functools

import jax
import jax.numpy as jnp
from jax.experimental import pallas as pl
from jax.experimental.pallas import tpu as pltpu


def _dropconnect_kernel(x_ref, o_ref, *, thresh, inv_keep, seed, lanes, tile_rows):
    shape = x_ref.shape  # (tile_rows, lanes)

    # Global element index of every slot in this tile (uint32 wraparound is fine,
    # it only feeds a hash).
    row = jax.lax.broadcasted_iota(jnp.int32, shape, 0)
    col = jax.lax.broadcasted_iota(jnp.int32, shape, 1)
    base = pl.program_id(0) * (tile_rows * lanes)
    idx = (base + row * lanes + col).astype(jnp.uint32)

    # Counter-based hash -> uniform uint32 bits (murmur3 fmix32 with a
    # golden-ratio pre-multiply, keyed by the seed). ~8 cheap VPU ops/element,
    # negligible for this memory-bound op.
    h = idx * jnp.uint32(0x9E3779B1)
    h = h ^ jnp.uint32(seed & 0xFFFFFFFF)
    h = h ^ (h >> jnp.uint32(16))
    h = h * jnp.uint32(0x85EBCA6B)
    h = h ^ (h >> jnp.uint32(13))
    h = h * jnp.uint32(0xC2B2AE35)
    h = h ^ (h >> jnp.uint32(16))

    keep = h < jnp.uint32(thresh)

    x = x_ref[...]
    scaled = x * jnp.asarray(inv_keep, dtype=x.dtype)  # compute in the input dtype
    o_ref[...] = jnp.where(keep, scaled, jnp.zeros_like(scaled))


def _choose_layout(total):
    """Pick a wide, lane-dense last dim; pad only if nothing divides."""
    for lanes in (2048, 1024, 512, 256, 128):
        if total % (8 * lanes) == 0:
            return lanes, 0
    lanes = 128
    pad = (-total) % (8 * lanes)
    return lanes, pad


def dropconnect(x, drop_prob, *, seed=0, training=True):
    """DropConnect forward. x: any shape (e.g. NCHW). Returns same shape/dtype."""
    if not training or drop_prob <= 0.0:
        return x
    if drop_prob >= 1.0:
        return jnp.zeros_like(x)

    keep_prob = 1.0 - float(drop_prob)
    inv_keep = 1.0 / keep_prob
    # uint32 threshold: bits < thresh  <=>  uniform < keep_prob
    thresh = int(round(keep_prob * (1 << 32)))
    thresh = max(0, min(thresh, (1 << 32) - 1))

    orig_shape = x.shape
    total = x.size
    lanes, pad = _choose_layout(total)
    padded = total + pad
    rows = padded // lanes

    x_flat = x.reshape(-1)
    if pad:
        x_flat = jnp.pad(x_flat, (0, pad))  # rare ragged fallback only
    x2 = x_flat.reshape(rows, lanes)

    # ~1 MiB per tile -> ~4 MiB with in+out double buffering; safe on every
    # generation's scoped VMEM default (16 MiB v5e, 32 MiB v6e/v7x).
    itemsize = jnp.dtype(x.dtype).itemsize
    target_bytes = 1 << 20
    tile_rows = (target_bytes // (lanes * itemsize)) // 8 * 8
    tile_rows = int(max(8, min(tile_rows, rows)))

    grid = (pl.cdiv(rows, tile_rows),)

    out2 = pl.pallas_call(
        functools.partial(
            _dropconnect_kernel,
            thresh=thresh,
            inv_keep=inv_keep,
            seed=int(seed),
            lanes=lanes,
            tile_rows=tile_rows,
        ),
        out_shape=jax.ShapeDtypeStruct((rows, lanes), x.dtype),
        grid=grid,
        in_specs=[pl.BlockSpec((tile_rows, lanes), lambda i: (i, 0))],
        out_specs=pl.BlockSpec((tile_rows, lanes), lambda i: (i, 0)),
        compiler_params=pltpu.CompilerParams(
            dimension_semantics=("parallel",),  # shard tiles across TCs (v7x megacore)
        ),
    )(x2)

    if pad:
        return out2.reshape(-1)[:total].reshape(orig_shape)
    return out2.reshape(orig_shape)


if __name__ == "__main__":
    key = jax.random.PRNGKey(0)
    x = jax.random.normal(key, (2, 4, 16, 16), dtype=jnp.float32)

    drop_prob = 0.25
    keep_prob = 1.0 - drop_prob

    y = jax.block_until_ready(dropconnect(x, drop_prob, seed=1234, training=True))
    assert y.shape == x.shape and y.dtype == x.dtype

    # Every output element must be either 0 or x / keep_prob.
    scaled = x / keep_prob
    is_zero = jnp.isclose(y, 0.0, atol=1e-6)
    is_scaled = jnp.isclose(y, scaled, rtol=1e-5, atol=1e-6)
    assert bool(jnp.all(is_zero | is_scaled)), "values must be 0 or x/keep_prob"

    # Keep-rate should be roughly keep_prob (loose statistical bound).
    frac_kept = float(jnp.mean((y != 0.0).astype(jnp.float32)))
    assert abs(frac_kept - keep_prob) < 0.1, f"keep fraction {frac_kept} off"

    # Ragged total exercises the padded fallback path.
    x_odd = jax.random.normal(jax.random.PRNGKey(1), (3, 5, 7, 11), dtype=jnp.float32)
    y_odd = jax.block_until_ready(dropconnect(x_odd, drop_prob, seed=7, training=True))
    assert y_odd.shape == x_odd.shape
    ok_odd = jnp.isclose(y_odd, 0.0, atol=1e-6) | jnp.isclose(
        y_odd, x_odd / keep_prob, rtol=1e-5, atol=1e-6
    )
    assert bool(jnp.all(ok_odd))

    # Eval mode is the identity.
    y_eval = jax.block_until_ready(dropconnect(x, drop_prob, training=False))
    assert bool(jnp.all(y_eval == x))

    print("KERNEL_OK")
</pallas_src>

<mosaic_0001>
module attributes {stable_mosaic.version = 11 : i64} {
  func.func @_dropconnect_kernel(%arg0: i32, %arg1: memref<8x256xf32, #tpu.memory_space<vmem>>, %arg2: memref<8x256xf32, #tpu.memory_space<vmem>>) attributes {dimension_semantics = [#tpu.dimension_semantics<parallel>], iteration_bounds = array<i64: 1>, scalar_prefetch = 0 : i64, scratch_operands = 0 : i64, tpu.core_type = #tpu.core_type<tc>, window_params = [{transform_indices = @transform_0, window_bounds = array<i64: 8, 256>}, {transform_indices = @transform_1, window_bounds = array<i64: 8, 256>}]} {
    %0 = tpu.iota {dimensions = array<i32: 0>} : vector<8x256xi32>
    %1 = tpu.iota {dimensions = array<i32: 1>} : vector<8x256xi32>
    %c2048_i32 = arith.constant 2048 : i32
    %2 = arith.muli %arg0, %c2048_i32 : i32
    %c256_i32 = arith.constant 256 : i32
    %3 = vector.broadcast %c256_i32 : i32 to vector<8x256xi32>
    %4 = arith.muli %0, %3 : vector<8x256xi32>
    %5 = vector.broadcast %2 : i32 to vector<8x256xi32>
    %6 = arith.addi %5, %4 : vector<8x256xi32>
    %7 = arith.addi %6, %1 : vector<8x256xi32>
    %c-1640531535_i32 = arith.constant -1640531535 : i32
    %8 = vector.broadcast %c-1640531535_i32 : i32 to vector<8x256xi32>
    %9 = arith.muli %7, %8 : vector<8x256xi32>
    %c1234_i32 = arith.constant 1234 : i32
    %10 = vector.broadcast %c1234_i32 : i32 to vector<8x256xi32>
    %11 = arith.xori %9, %10 : vector<8x256xi32>
    %c16_i32 = arith.constant 16 : i32
    %12 = vector.broadcast %c16_i32 : i32 to vector<8x256xi32>
    %13 = arith.shrui %11, %12 : vector<8x256xi32>
    %14 = arith.xori %11, %13 : vector<8x256xi32>
    %c-2048144789_i32 = arith.constant -2048144789 : i32
    %15 = vector.broadcast %c-2048144789_i32 : i32 to vector<8x256xi32>
    %16 = arith.muli %14, %15 : vector<8x256xi32>
    %c13_i32 = arith.constant 13 : i32
    %17 = vector.broadcast %c13_i32 : i32 to vector<8x256xi32>
    %18 = arith.shrui %16, %17 : vector<8x256xi32>
    %19 = arith.xori %16, %18 : vector<8x256xi32>
    %c-1028477387_i32 = arith.constant -1028477387 : i32
    %20 = vector.broadcast %c-1028477387_i32 : i32 to vector<8x256xi32>
    %21 = arith.muli %19, %20 : vector<8x256xi32>
    %c16_i32_0 = arith.constant 16 : i32
    %22 = vector.broadcast %c16_i32_0 : i32 to vector<8x256xi32>
    %23 = arith.shrui %21, %22 : vector<8x256xi32>
    %24 = arith.xori %21, %23 : vector<8x256xi32>
    %c-1073741824_i32 = arith.constant -1073741824 : i32
    %25 = vector.broadcast %c-1073741824_i32 : i32 to vector<8x256xi32>
    %26 = arith.cmpi ult, %24, %25 : vector<8x256xi32>
    %c0 = arith.constant 0 : index
    %c0_1 = arith.constant 0 : index
    %27 = vector.load %arg1[%c0, %c0_1] : memref<8x256xf32, #tpu.memory_space<vmem>>, vector<8x256xf32>
    %cst = arith.constant 1.33333337 : f32
    %28 = vector.broadcast %cst : f32 to vector<8x256xf32>
    %29 = arith.mulf %27, %28 : vector<8x256xf32>
    %cst_2 = arith.constant 0.000000e+00 : f32
    %30 = vector.broadcast %cst_2 : f32 to vector<8x256xf32>
    %31 = arith.select %26, %29, %30 : vector<8x256xi1>, vector<8x256xf32>
    %c0_3 = arith.constant 0 : index
    %c0_4 = arith.constant 0 : index
    %32 = vector.load %arg2[%c0_3, %c0_4] : memref<8x256xf32, #tpu.memory_space<vmem>>, vector<8x256xf32>
    tpu.vector_store %arg2[%c0_3, %c0_4], %31 {strides = array<i32>} : memref<8x256xf32, #tpu.memory_space<vmem>>, vector<8x256xf32>,
    return
  }
  func.func @transform_0(%arg0: i32) -> (i32, i32) {
    %c0_i32 = arith.constant 0 : i32
    %c0_i32_0 = arith.constant 0 : i32
    return %arg0, %c0_i32 : i32, i32
  }
  func.func @transform_1(%arg0: i32) -> (i32, i32) {
    %c0_i32 = arith.constant 0 : i32
    %c0_i32_0 = arith.constant 0 : i32
    return %arg0, %c0_i32 : i32, i32
  }
}

</mosaic_0001>

<llo_original>
// kernel: tpu_custom_call.1
$region0: #{tpu_custom_call.1}
  #allocation0 [shape = 'u32[]', space=smem, size = 0x4, offset = 0x4, fixed_abs, tag = 'smem constant byte address 0x4 - core index']
  #allocation1 [shape = 'u32[72,128]{1,0:T(1,128)}', space=vmem, size = 0x9000, scoped, tag = 'internal scratch']
  %s0 = inlined_call_operand.hbm [shape: f32[8,256], index: 0, kind: input, shape index: {}]
  %s1 = inlined_call_operand.hbm [shape: f32[8,256], index: 1, kind: output, shape index: {}]
  %s2 = sld [smem:[#allocation0]]
  $region18: #{tpu_custom_call.1} parent=0
    _
  %s4 = ssub.s32 1, %s2
  %s5 = scalar_select 0, %s4, %s2
  $region1: #{tpu_custom_call.1} parent=0
    #allocation2 [shape = 'u8[8192]{0}', space=vmem, size = 0x2000, scoped, tag = 'input window, operand 0, single buffered']
    #allocation3 [shape = 's32[1]{0}', space=sflag, size = 0x4, scoped, tag = 'scoped memory for tpu_custom_call.1']
    #allocation4 [shape = 's32[1]{0}', space=sflag, size = 0x4, scoped, tag = 'scoped memory for tpu_custom_call.1']
    #allocation5 [shape = 'u8[8192]{0}', space=vmem, size = 0x2000, scoped, tag = 'output window, operand 0, single buffered']
    %6 = vsyncpa [#allocation3], 0
    %7 = vsyncpa [#allocation4], 0
    // Predicated region
    $region2: #{tpu_custom_call.1} parent=1 // pred_check
      _
    $region3: #{tpu_custom_call.1} parent=1 // pred_check_branch
      %9 = sbr.rel (0) target = $region5
    $region4: #{tpu_custom_call.1} parent=1 // pred_region
      %11 = vsyncadd [#allocation3], 0
      %s13 = sshll.u32 %s0, 4
      %s14 = int_to_ptr.hbm [resolvable:$true] %s13
      %s15 = sshll.u32 [#allocation2], 4
      %s16 = int_to_ptr.vmem [resolvable:$true] %s15
      %18 = dma.hbm_to_vmem [thread:$0]  %s14, 256, %s16, [#allocation3]
    $region5: #{tpu_custom_call.1} parent=1 // pred_fallthru
      _
    // Predicated region
    $region6: #{tpu_custom_call.1} parent=1 // pred_check
      _
    $region7: #{tpu_custom_call.1} parent=1 // pred_check_branch
      %20 = sbr.rel (0) target = $region9
    $region8: #{tpu_custom_call.1} parent=1 // pred_region
      %22 = dma.done [#allocation3], 256
    $region9: #{tpu_custom_call.1} parent=1 // pred_fallthru
      _
    %v23 = vlaneseq
    %v24 = vshrl.u32 %v23, 7
    %v25 = vlaneseq
    %v26 = vand.u32 %v25, 127
    %v27 = vadd.s32 %v26, 128
    %s28 = smul.u32 0, 2048
    %v29 = vmul.u32 %v24, 256
    %v30 = vstv %s28
    %v31 = vadd.s32 %v30, %v29
    %v32 = vadd.s32 %v31, %v26
    %v33 = vadd.s32 %v31, %v27
    %v34 = vmul.u32 %v32, 2654435761
    %v35 = vmul.u32 %v33, 2654435761
    %v36 = vxor.u32 %v34, 1234
    %v37 = vxor.u32 %v35, 1234
    %v38 = vshrl.u32 %v36, 16
    %v39 = vshrl.u32 %v37, 16
    %v40 = vxor.u32 %v36, %v38
    %v41 = vxor.u32 %v37, %v39
    %v42 = vmul.u32 %v40, 2246822507
    %v43 = vmul.u32 %v41, 2246822507
    %v44 = vshrl.u32 %v42, 13
    %v45 = vshrl.u32 %v43, 13
    %v46 = vxor.u32 %v42, %v44
    %v47 = vxor.u32 %v43, %v45
    %v48 = vmul.u32 %v46, 3266489909
    %v49 = vmul.u32 %v47, 3266489909
    %v50 = vshrl.u32 %v48, 16
    %v51 = vshrl.u32 %v49, 16
    %v52 = vxor.u32 %v48, %v50
    %v53 = vxor.u32 %v49, %v51
    %v54 = vadd.s32 %v52, 2147483648
    %vm56 = vcmp.lt.s32.totalorder %v54, 1073741824
    %v57 = vadd.s32 %v53, 2147483648
    %vm59 = vcmp.lt.s32.totalorder %v57, 1073741824
    %v60 = vld [vmem:[#allocation2] sm:$0xff]
    %v61 = vld [vmem:[#allocation2 + $0x8] sm:$0xff]
    %v62 = vmul.f32 %v60, 1.3333334
    %v63 = vmul.f32 %v61, 1.3333334
    %v64 = vsel %vm56, %v62, 0.0
    %v65 = vsel %vm59, %v63, 0.0
    %66 = vst [vmem:[#allocation5] sm:$0xff] %v64
    %67 = vst [vmem:[#allocation5 + $0x8] sm:$0xff] %v65
    // Predicated region
    $region10: #{tpu_custom_call.1} parent=1 // pred_check
      _
    $region11: #{tpu_custom_call.1} parent=1 // pred_check_branch
      %69 = sbr.rel (0) target = $region13
    $region12: #{tpu_custom_call.1} parent=1 // pred_region
      %71 = vsyncadd [#allocation4], 0
      %s73 = sshll.u32 [#allocation5], 4
      %s74 = int_to_ptr.vmem [resolvable:$true] %s73
      %s75 = sshll.u32 %s1, 4
      %s76 = int_to_ptr.hbm [resolvable:$true] %s75
      %78 = dma.vmem_to_hbm [thread:$0]  %s74, 256, %s76, [#allocation4]
    $region13: #{tpu_custom_call.1} parent=1 // pred_fallthru
      _
    // Predicated region
    $region14: #{tpu_custom_call.1} parent=1 // pred_check
      _
    $region15: #{tpu_custom_call.1} parent=1 // pred_check_branch
      %80 = sbr.rel (0) target = $region17
    $region16: #{tpu_custom_call.1} parent=1 // pred_region
      %82 = dma.done [#allocation4], 256
    $region17: #{tpu_custom_call.1} parent=1 // pred_fallthru
      _
    %83 = vsyncpa [#allocation3], 1
    %84 = vsyncpa [#allocation4], 1

</llo_original>
